<compile_context>
chip_gen: v7x
topology: tpu7x:2x2x1
jax: 0.10.0
libtpu: 0.0.40
codegen_flags: <defaults>
</compile_context>

<pallas_src>
import functools

import jax
import jax.numpy as jnp
from jax.experimental import pallas as pl
from jax.experimental.pallas import tpu as pltpu

IN_DIM = 4       # CartPole observation size
MAX_F = 64       # widest layer; every layer is zero-padded to this
N_LAYERS = 4
LANE = 128       # TPU lane width


def _round_up(n, m):
    return ((n + m - 1) // m) * m


def valuenet_kernel(x_ref, w_ref, b_ref, o_ref):
    """One batch tile of the fused 4->64->64->32->1 MLP.

    x_ref: (IN_DIM, TB)        bf16  activations, batch on lanes
    w_ref: (4, 64, 64)         bf16  per-layer (out, in) weights, zero padded
    b_ref: (64, 4)             f32   per-layer biases in columns, zero padded
    o_ref: (1, TB)             f32   value output, batch on lanes
    """
    x = x_ref[...]                                    # (4, TB) bf16
    b = b_ref[...]                                    # (64, 4) f32

    # Layer 1: 4 -> 64 (slice the 4 real input columns out of the padded slab).
    w1 = w_ref[0][:, :IN_DIM]                         # (64, 4) bf16
    h = jnp.dot(w1, x, preferred_element_type=jnp.float32) + b[:, 0:1]
    h = jnp.maximum(h, 0.0)

    # Layer 2: 64 -> 64.
    h = jnp.dot(w_ref[1], h.astype(jnp.bfloat16),
                preferred_element_type=jnp.float32) + b[:, 1:2]
    h = jnp.maximum(h, 0.0)

    # Layer 3: 64 -> 32 (padded output rows 32..63 have zero weights/bias, so
    # they are exactly 0 after ReLU and contribute nothing to layer 4).
    h = jnp.dot(w_ref[2], h.astype(jnp.bfloat16),
                preferred_element_type=jnp.float32) + b[:, 2:3]
    h = jnp.maximum(h, 0.0)

    # Layer 4: 32 -> 1, folded into the transposed layout (lane axis = batch
    # stays fully dense). Only row 0 is the real value head.
    v = jnp.dot(w_ref[3], h.astype(jnp.bfloat16),
                preferred_element_type=jnp.float32) + b[:, 3:4]

    o_ref[...] = v[0:1, :].astype(o_ref.dtype)


def pack_params(params):
    """Pack PyTorch-layout params [(w (out,in), b (out,)) x 4] into two slabs."""
    w_slab = jnp.zeros((N_LAYERS, MAX_F, MAX_F), jnp.float32)
    b_slab = jnp.zeros((MAX_F, N_LAYERS), jnp.float32)
    for l, (w, bias) in enumerate(params):
        out_f, in_f = w.shape
        w_slab = w_slab.at[l, :out_f, :in_f].set(w)
        b_slab = b_slab.at[:out_f, l].set(bias)
    return w_slab.astype(jnp.bfloat16), b_slab


@functools.partial(jax.jit, static_argnames=("block_b",))
def value_net_forward(x, w_slab, b_slab, *, block_b=512):
    """x: (B, 4) f32 -> (B, 1) f32."""
    B = x.shape[0]
    tb = min(block_b, _round_up(B, LANE))    # lane-dense batch tile (mult. of 128)
    b_pad = _round_up(B, tb)

    # Layout plumbing (outside the kernel): pad batch, put batch on lanes, bf16.
    x_pad = jnp.pad(x, ((0, b_pad - B), (0, 0)))
    xt = x_pad.T.astype(jnp.bfloat16)        # (4, b_pad)

    out = pl.pallas_call(
        valuenet_kernel,
        out_shape=jax.ShapeDtypeStruct((1, b_pad), jnp.float32),
        grid=(b_pad // tb,),
        in_specs=[
            pl.BlockSpec((IN_DIM, tb), lambda i: (0, i)),                 # streamed
            pl.BlockSpec((N_LAYERS, MAX_F, MAX_F), lambda i: (0, 0, 0)),  # resident
            pl.BlockSpec((MAX_F, N_LAYERS), lambda i: (0, 0)),            # resident
        ],
        out_specs=pl.BlockSpec((1, tb), lambda i: (0, i)),
        compiler_params=pltpu.CompilerParams(
            dimension_semantics=("parallel",),   # v7x: shard batch tiles over 2 TCs
        ),
    )(xt, w_slab, b_slab)

    return out[0, :B].reshape(B, 1)


def init_params(key):
    """PyTorch nn.Linear-style init: w (out, in), b (out,), U(-1/sqrt(in), 1/sqrt(in))."""
    sizes = [(4, 64), (64, 64), (64, 32), (32, 1)]
    params = []
    for fan_in, fan_out in sizes:
        key, kw, kb = jax.random.split(key, 3)
        bound = 1.0 / (fan_in ** 0.5)
        w = jax.random.uniform(kw, (fan_out, fan_in), jnp.float32, -bound, bound)
        b = jax.random.uniform(kb, (fan_out,), jnp.float32, -bound, bound)
        params.append((w, b))
    return params


def reference_forward_f32(x, params):
    h = x
    for l, (w, b) in enumerate(params):
        h = h @ w.T + b
        if l < len(params) - 1:
            h = jnp.maximum(h, 0.0)
    return h


def reference_forward_bf16(x, params):
    """Mirrors the kernel numerics: bf16 matmul operands, f32 accumulate/bias/ReLU."""
    h = x.astype(jnp.bfloat16)
    for l, (w, b) in enumerate(params):
        z = jnp.dot(h, w.T.astype(jnp.bfloat16),
                    preferred_element_type=jnp.float32) + b
        if l < len(params) - 1:
            h = jnp.maximum(z, 0.0).astype(jnp.bfloat16)
        else:
            h = z
    return h


if __name__ == "__main__":
    key = jax.random.PRNGKey(0)
    key, kx = jax.random.split(key)

    B = 8  # small smoke-test batch; CartPole observation dim is 4
    x = jax.random.normal(kx, (B, 4), jnp.float32)

    params = init_params(key)
    w_slab, b_slab = pack_params(params)

    out = value_net_forward(x, w_slab, b_slab)
    out = jax.block_until_ready(out)
    assert out.shape == (B, 1), out.shape

    # Exact-semantics check vs. a pure-JAX reference using identical bf16-matmul /
    # f32-accumulate numerics.
    ref = reference_forward_bf16(x, params)
    assert jnp.allclose(out, ref, atol=1e-3, rtol=1e-3), (out, ref)

    # Sanity check vs. the full-f32 reference (loose tolerance: deliberate
    # bf16-on-MXU precision/throughput trade, per perf review).
    ref32 = reference_forward_f32(x, params)
    assert jnp.allclose(out, ref32, atol=5e-2, rtol=5e-2), (out, ref32)

    print("KERNEL_OK")
</pallas_src>

<mosaic_0001>
module attributes {stable_mosaic.version = 11 : i64} {
  func.func @valuenet_kernel(%arg0: i32, %arg1: memref<4x128xbf16, #tpu.memory_space<vmem>>, %arg2: memref<4x64x64xbf16, #tpu.memory_space<vmem>>, %arg3: memref<64x4xf32, #tpu.memory_space<vmem>>, %arg4: memref<1x128xf32, #tpu.memory_space<vmem>>) attributes {dimension_semantics = [#tpu.dimension_semantics<parallel>], iteration_bounds = array<i64: 1>, scalar_prefetch = 0 : i64, scratch_operands = 0 : i64, tpu.core_type = #tpu.core_type<tc>, window_params = [{transform_indices = @transform_0, window_bounds = array<i64: 4, 128>}, {pipeline_mode = #tpu.pipeline_mode<synchronous>, transform_indices = @transform_1, window_bounds = array<i64: 4, 64, 64>}, {pipeline_mode = #tpu.pipeline_mode<synchronous>, transform_indices = @transform_2, window_bounds = array<i64: 64, 4>}, {transform_indices = @transform_3, window_bounds = array<i64: 1, 128>}]} {
    %c0 = arith.constant 0 : index
    %c0_0 = arith.constant 0 : index
    %0 = vector.load %arg1[%c0, %c0_0] : memref<4x128xbf16, #tpu.memory_space<vmem>>, vector<4x128xbf16>
    %c0_1 = arith.constant 0 : index
    %c0_2 = arith.constant 0 : index
    %1 = vector.load %arg3[%c0_1, %c0_2] : memref<64x4xf32, #tpu.memory_space<vmem>>, vector<64x4xf32>
    %c0_3 = arith.constant 0 : index
    %c0_4 = arith.constant 0 : index
    %c0_5 = arith.constant 0 : index
    %2 = vector.load %arg2[%c0_3, %c0_4, %c0_5] : memref<4x64x64xbf16, #tpu.memory_space<vmem>>, vector<1x64x64xbf16>
    %3 = vector.shape_cast %2 : vector<1x64x64xbf16> to vector<64x64xbf16>
    %4 = vector.extract_strided_slice %3 {offsets = [0, 0], sizes = [64, 4], strides = [1, 1]} : vector<64x64xbf16> to vector<64x4xbf16>
    %cst = arith.constant dense<0.000000e+00> : vector<64x128xf32>
    %5 = tpu.matmul %4, %0, %cst {dimension_numbers = #tpu.dot_dimension_numbers<[1], [0], [0], [1], [0, 0, 1, 1], [], []>} : vector<64x4xbf16>, vector<4x128xbf16>, vector<64x128xf32> -> vector<64x128xf32>
    %6 = vector.extract_strided_slice %1 {offsets = [0, 0], sizes = [64, 1], strides = [1, 1]} : vector<64x4xf32> to vector<64x1xf32>
    %7 = vector.broadcast %6 : vector<64x1xf32> to vector<64x128xf32>
    %8 = arith.addf %5, %7 : vector<64x128xf32>
    %cst_6 = arith.constant 0.000000e+00 : f32
    %9 = vector.broadcast %cst_6 : f32 to vector<64x128xf32>
    %10 = arith.maximumf %8, %9 : vector<64x128xf32>
    %c1 = arith.constant 1 : index
    %c0_7 = arith.constant 0 : index
    %c0_8 = arith.constant 0 : index
    %11 = vector.load %arg2[%c1, %c0_7, %c0_8] : memref<4x64x64xbf16, #tpu.memory_space<vmem>>, vector<1x64x64xbf16>
    %12 = vector.shape_cast %11 : vector<1x64x64xbf16> to vector<64x64xbf16>
    %13 = arith.truncf %10 : vector<64x128xf32> to vector<64x128xbf16>
    %cst_9 = arith.constant dense<0.000000e+00> : vector<64x128xf32>
    %14 = tpu.matmul %12, %13, %cst_9 {dimension_numbers = #tpu.dot_dimension_numbers<[1], [0], [0], [1], [0, 0, 1, 1], [], []>} : vector<64x64xbf16>, vector<64x128xbf16>, vector<64x128xf32> -> vector<64x128xf32>
    %15 = vector.extract_strided_slice %1 {offsets = [0, 1], sizes = [64, 1], strides = [1, 1]} : vector<64x4xf32> to vector<64x1xf32>
    %16 = vector.broadcast %15 : vector<64x1xf32> to vector<64x128xf32>
    %17 = arith.addf %14, %16 : vector<64x128xf32>
    %cst_10 = arith.constant 0.000000e+00 : f32
    %18 = vector.broadcast %cst_10 : f32 to vector<64x128xf32>
    %19 = arith.maximumf %17, %18 : vector<64x128xf32>
    %c2 = arith.constant 2 : index
    %c0_11 = arith.constant 0 : index
    %c0_12 = arith.constant 0 : index
    %20 = vector.load %arg2[%c2, %c0_11, %c0_12] : memref<4x64x64xbf16, #tpu.memory_space<vmem>>, vector<1x64x64xbf16>
    %21 = vector.shape_cast %20 : vector<1x64x64xbf16> to vector<64x64xbf16>
    %22 = arith.truncf %19 : vector<64x128xf32> to vector<64x128xbf16>
    %cst_13 = arith.constant dense<0.000000e+00> : vector<64x128xf32>
    %23 = tpu.matmul %21, %22, %cst_13 {dimension_numbers = #tpu.dot_dimension_numbers<[1], [0], [0], [1], [0, 0, 1, 1], [], []>} : vector<64x64xbf16>, vector<64x128xbf16>, vector<64x128xf32> -> vector<64x128xf32>
    %24 = vector.extract_strided_slice %1 {offsets = [0, 2], sizes = [64, 1], strides = [1, 1]} : vector<64x4xf32> to vector<64x1xf32>
    %25 = vector.broadcast %24 : vector<64x1xf32> to vector<64x128xf32>
    %26 = arith.addf %23, %25 : vector<64x128xf32>
    %cst_14 = arith.constant 0.000000e+00 : f32
    %27 = vector.broadcast %cst_14 : f32 to vector<64x128xf32>
    %28 = arith.maximumf %26, %27 : vector<64x128xf32>
    %c3 = arith.constant 3 : index
    %c0_15 = arith.constant 0 : index
    %c0_16 = arith.constant 0 : index
    %29 = vector.load %arg2[%c3, %c0_15, %c0_16] : memref<4x64x64xbf16, #tpu.memory_space<vmem>>, vector<1x64x64xbf16>
    %30 = vector.shape_cast %29 : vector<1x64x64xbf16> to vector<64x64xbf16>
    %31 = arith.truncf %28 : vector<64x128xf32> to vector<64x128xbf16>
    %cst_17 = arith.constant dense<0.000000e+00> : vector<64x128xf32>
    %32 = tpu.matmul %30, %31, %cst_17 {dimension_numbers = #tpu.dot_dimension_numbers<[1], [0], [0], [1], [0, 0, 1, 1], [], []>} : vector<64x64xbf16>, vector<64x128xbf16>, vector<64x128xf32> -> vector<64x128xf32>
    %33 = vector.extract_strided_slice %1 {offsets = [0, 3], sizes = [64, 1], strides = [1, 1]} : vector<64x4xf32> to vector<64x1xf32>
    %34 = vector.broadcast %33 : vector<64x1xf32> to vector<64x128xf32>
    %35 = arith.addf %32, %34 : vector<64x128xf32>
    %36 = vector.extract_strided_slice %35 {offsets = [0, 0], sizes = [1, 128], strides = [1, 1]} : vector<64x128xf32> to vector<1x128xf32>
    %c0_18 = arith.constant 0 : index
    %c0_19 = arith.constant 0 : index
    %37 = vector.load %arg4[%c0_18, %c0_19] : memref<1x128xf32, #tpu.memory_space<vmem>>, vector<1x128xf32>
    tpu.vector_store %arg4[%c0_18, %c0_19], %36 {strides = array<i32>} : memref<1x128xf32, #tpu.memory_space<vmem>>, vector<1x128xf32>,
    return
  }
  func.func @transform_0(%arg0: i32) -> (i32, i32) {
    %c0_i32 = arith.constant 0 : i32
    %c0_i32_0 = arith.constant 0 : i32
    return %c0_i32, %arg0 : i32, i32
  }
  func.func @transform_1(%arg0: i32) -> (i32, i32, i32) {
    %c0_i32 = arith.constant 0 : i32
    %c0_i32_0 = arith.constant 0 : i32
    %c0_i32_1 = arith.constant 0 : i32
    %c0_i32_2 = arith.constant 0 : i32
    return %c0_i32, %c0_i32_0, %c0_i32_1 : i32, i32, i32
  }
  func.func @transform_2(%arg0: i32) -> (i32, i32) {
    %c0_i32 = arith.constant 0 : i32
    %c0_i32_0 = arith.constant 0 : i32
    %c0_i32_1 = arith.constant 0 : i32
    return %c0_i32, %c0_i32_0 : i32, i32
  }
  func.func @transform_3(%arg0: i32) -> (i32, i32) {
    %c0_i32 = arith.constant 0 : i32
    %c0_i32_0 = arith.constant 0 : i32
    return %c0_i32, %arg0 : i32, i32
  }
}

</mosaic_0001>

<llo_original>
// kernel: value_net_forward.1
$region0: #{value_net_forward.1}
  #allocation0 [shape = 'u32[]', space=smem, size = 0x4, offset = 0x4, fixed_abs, tag = 'smem constant byte address 0x4 - core index']
  #allocation1 [shape = 'u32[144,128]{1,0:T(1,128)}', space=vmem, size = 0x12000, scoped, tag = 'internal scratch']
  %s0 = inlined_call_operand.vmem [shape: bf16[4,128], index: 0, kind: input, shape index: {}]
  %s1 = inlined_call_operand.hbm [shape: bf16[4,64,64], index: 1, kind: input, shape index: {}]
  %s2 = inlined_call_operand.vmem [shape: f32[64,4], index: 2, kind: input, shape index: {}]
  %s3 = inlined_call_operand.vmem [shape: f32[1,128], index: 3, kind: output, shape index: {}]
  %s4 = sld [smem:[#allocation0]]
  $region26: #{value_net_forward.1} parent=0
    _
  %s6 = ssub.s32 1, %s4
  %s7 = scalar_select 0, %s6, %s4
  $region1: #{value_net_forward.1} parent=0
    #allocation2 [shape = 'u8[65536]{0}', space=vmem, size = 0x10000, scoped, tag = 'input window, operand 1, single buffered']
    #allocation3 [shape = 's32[1]{0}', space=sflag, size = 0x4, scoped, tag = 'scoped memory for value_net_forward.1']
    %8 = vsyncpa [#allocation3], 0
    // Predicated region
    $region2: #{value_net_forward.1} parent=1 // pred_check
      _
    $region3: #{value_net_forward.1} parent=1 // pred_check_branch
      %10 = sbr.rel (0) target = $region5
    $region4: #{value_net_forward.1} parent=1 // pred_region
      _
    $region5: #{value_net_forward.1} parent=1 // pred_fallthru
      _
    // Predicated region
    $region6: #{value_net_forward.1} parent=1 // pred_check
      _
    $region7: #{value_net_forward.1} parent=1 // pred_check_branch
      %12 = sbr.rel (0) target = $region9
    $region8: #{value_net_forward.1} parent=1 // pred_region
      %s14 = ssub.s32 2048, 2048
      %15 = vsyncadd [#allocation3], %s14
      %s16 = sshll.u32 [#allocation2], 4
      %s17 = int_to_ptr.vmem [resolvable:$true] %s16
      %22 = dma.hbm_to_vmem [thread:$0]  %s1, 2048, %s17, [#allocation3], 64, 64, 4
    $region9: #{value_net_forward.1} parent=1 // pred_fallthru
      _
    // Predicated region
    $region10: #{value_net_forward.1} parent=1 // pred_check
      _
    $region11: #{value_net_forward.1} parent=1 // pred_check_branch
      %24 = sbr.rel (0) target = $region13
    $region12: #{value_net_forward.1} parent=1 // pred_region
      _
    $region13: #{value_net_forward.1} parent=1 // pred_fallthru
      _
    // Predicated region
    $region14: #{value_net_forward.1} parent=1 // pred_check
      _
    $region15: #{value_net_forward.1} parent=1 // pred_check_branch
      %26 = sbr.rel (0) target = $region17
    $region16: #{value_net_forward.1} parent=1 // pred_region
      %27 = dma.done [#allocation3], 2048
    $region17: #{value_net_forward.1} parent=1 // pred_fallthru
      _
    %v29 = vld [vmem:[%s0] sm:$0x3]
    %v30 = vld [vmem:[%s2] sm:$0xff]
    %v31 = vld [vmem:[%s2 + $0x8] sm:$0xff]
    %v32 = vld [vmem:[%s2 + $0x10] sm:$0xff]
    %v33 = vld [vmem:[%s2 + $0x18] sm:$0xff]
    %v34 = vld [vmem:[%s2 + $0x20] sm:$0xff]
    %v35 = vld [vmem:[%s2 + $0x28] sm:$0xff]
    %v36 = vld [vmem:[%s2 + $0x30] sm:$0xff]
    %v37 = vld [vmem:[%s2 + $0x38] sm:$0xff]
    %v38 = vld [vmem:[#allocation2] sm:$0xf]
    %v39 = vld [vmem:[#allocation2 + $0x4] sm:$0xf]
    %v40 = vld [vmem:[#allocation2 + $0x8] sm:$0xf]
    %v41 = vld [vmem:[#allocation2 + $0xc] sm:$0xf]
    %v42 = vld [vmem:[#allocation2 + $0x10] sm:$0xf]
    %v43 = vld [vmem:[#allocation2 + $0x14] sm:$0xf]
    %v44 = vld [vmem:[#allocation2 + $0x18] sm:$0xf]
    %v45 = vld [vmem:[#allocation2 + $0x1c] sm:$0xf]
    %47 = vset.pattern.permute.xlu0 0
    %48 = vperm.xlu0 %47, %v30
    %v49 = vpop.permute.xlu0 %48
    %52 = vset.pattern.permute.xlu0 0
    %53 = vperm.xlu0 %52, %v31
    %v54 = vpop.permute.xlu0 %53
    %57 = vset.pattern.permute.xlu0 0
    %58 = vperm.xlu0 %57, %v32
    %v59 = vpop.permute.xlu0 %58
    %62 = vset.pattern.permute.xlu0 0
    %63 = vperm.xlu0 %62, %v33
    %v64 = vpop.permute.xlu0 %63
    %67 = vset.pattern.permute.xlu0 0
    %68 = vperm.xlu0 %67, %v34
    %v69 = vpop.permute.xlu0 %68
    %72 = vset.pattern.permute.xlu0 0
    %73 = vperm.xlu0 %72, %v35
    %v74 = vpop.permute.xlu0 %73
    %77 = vset.pattern.permute.xlu0 0
    %78 = vperm.xlu0 %77, %v36
    %v79 = vpop.permute.xlu0 %78
    %82 = vset.pattern.permute.xlu0 0
    %83 = vperm.xlu0 %82, %v37
    %v84 = vpop.permute.xlu0 %83
    %v94 = vunpack.c.l.b16 %v38
    %v95 = vunpack.c.l.b16 %v39
    %v96 = vunpack.c.l.b16 %v40
    %v97 = vunpack.c.l.b16 %v41
    %v98 = vunpack.c.l.b16 %v42
    %v99 = vunpack.c.l.b16 %v43
    %v100 = vunpack.c.l.b16 %v44
    %v101 = vunpack.c.l.b16 %v45
    %v102 = vpack.c.b16 %v95, %v94
    %v103 = vpack.c.b16 %v97, %v96
    %v104 = vpack.c.b16 %v99, %v98
    %v105 = vpack.c.b16 %v101, %v100
    %vm106 = vcmask 31744
    %v108 = vsel %vm106, %v102, 0
    %v111 = vsel %vm106, %v103, 0
    %v114 = vsel %vm106, %v104, 0
    %v117 = vsel %vm106, %v105, 0
    %vm119 = vcmask 1041408
    %v121 = vsel %vm119, %v29, 0
    %123 = vmatprep.subr.bf16.mxu0 0
    %124 = vmatpush1.bf16.msra.mxu0 %v121
    %125 = vmatprep.subr.bf16.mxu0 0
    %126 = vmatpush1.bf16.msra.mxu0 0
    %127 = vmatprep.subr.bf16.mxu0 0
    %128 = vmatpush1.bf16.msra.mxu0 0
    %129 = vmatprep.subr.bf16.mxu0 0
    %130 = vmatpush1.bf16.msra.mxu0 0
    %131 = vmatprep.subr.bf16.mxu0 0
    %132 = vmatpush1.bf16.msra.mxu0 0
    %133 = vmatprep.subr.bf16.mxu0 0
    %134 = vmatpush1.bf16.msra.mxu0 0
    %135 = vmatprep.subr.bf16.mxu0 0
    %136 = vmatpush1.bf16.msra.mxu0 0
    %137 = vmatprep.subr.bf16.mxu0 0
    %138 = vmatpush1.bf16.msra.mxu0 0
    %139 = vmatprep.subr.bf16.mxu0 0
    %140 = vmatpush1.bf16.msra.mxu0 0
    %141 = vmatprep.subr.bf16.mxu0 0
    %142 = vmatpush1.bf16.msra.mxu0 0
    %143 = vmatprep.subr.bf16.mxu0 0
    %144 = vmatpush1.bf16.msra.mxu0 0
    %145 = vmatprep.subr.bf16.mxu0 0
    %146 = vmatpush1.bf16.msra.mxu0 0
    %147 = vmatprep.subr.bf16.mxu0 0
    %148 = vmatpush1.bf16.msra.mxu0 0
    %149 = vmatprep.subr.bf16.mxu0 0
    %150 = vmatpush1.bf16.msra.mxu0 0
    %151 = vmatprep.subr.bf16.mxu0 0
    %152 = vmatpush1.bf16.msra.mxu0 0
    %153 = vmatprep.subr.bf16.mxu0 0
    %154 = vmatpush1.bf16.msra.mxu0 0
    %155 = vmatprep.mubr.bf16.mxu0 0
    %156 = vmatmul.mubr.bf16.gmra.mrb[0].mxu0 %v108
    %v157 = vpop.f32.mrb[0].mxu0
    %v158 = vadd.f32 %v49, %v157
    %v159 = vpop.f32.mrb[0].mxu0
    %v160 = vpop.f32.mrb[0].mxu0
    %v161 = vadd.f32 %v54, %v160
    %v162 = vpop.f32.mrb[0].mxu0
    %163 = vmatprep.mubr.bf16.mxu0 0
    %164 = vmatmul.mubr.bf16.gmra.mrb[0].mxu0 %v111
    %v165 = vpop.f32.mrb[0].mxu0
    %v166 = vadd.f32 %v59, %v165
    %v167 = vpop.f32.mrb[0].mxu0
    %v168 = vpop.f32.mrb[0].mxu0
    %v169 = vadd.f32 %v64, %v168
    %v170 = vpop.f32.mrb[0].mxu0
    %171 = vmatprep.mubr.bf16.mxu0 0
    %172 = vmatmul.mubr.bf16.gmra.mrb[0].mxu0 %v114
    %v173 = vpop.f32.mrb[0].mxu0
    %v174 = vadd.f32 %v69, %v173
    %v175 = vpop.f32.mrb[0].mxu0
    %v176 = vpop.f32.mrb[0].mxu0
    %v177 = vadd.f32 %v74, %v176
    %v178 = vpop.f32.mrb[0].mxu0
    %179 = vmatprep.mubr.bf16.mxu0 0
    %180 = vmatmul.mubr.bf16.gmra.mrb[0].mxu0 %v117
    %v181 = vpop.f32.mrb[0].mxu0
    %v182 = vadd.f32 %v79, %v181
    %v183 = vpop.f32.mrb[0].mxu0
    %v184 = vpop.f32.mrb[0].mxu0
    %v185 = vadd.f32 %v84, %v184
    %v186 = vpop.f32.mrb[0].mxu0
    %187 = vdwg.mxu0
    %v188 = vmax.f32 %v158, 0.0
    %v189 = vmax.f32 %v161, 0.0
    %v190 = vmax.f32 %v166, 0.0
    %v191 = vmax.f32 %v169, 0.0
    %v192 = vmax.f32 %v174, 0.0
    %v193 = vmax.f32 %v177, 0.0
    %v194 = vmax.f32 %v182, 0.0
    %v195 = vmax.f32 %v185, 0.0
    %s196 = scalar_lea.vmem [#allocation2], 32
    %v197 = vld [vmem:[%s196] sm:$0xf]
    %v198 = vld [vmem:[%s196 + $0x4] sm:$0xf]
    %v199 = vld [vmem:[%s196 + $0x8] sm:$0xf]
    %v200 = vld [vmem:[%s196 + $0xc] sm:$0xf]
    %v201 = vld [vmem:[%s196 + $0x10] sm:$0xf]
    %v202 = vld [vmem:[%s196 + $0x14] sm:$0xf]
    %v203 = vld [vmem:[%s196 + $0x18] sm:$0xf]
    %v204 = vld [vmem:[%s196 + $0x1c] sm:$0xf]
    %v205 = vpack.c.bf16 %v189, %v188
    %v206 = vpack.c.bf16 %v191, %v190
    %v207 = vpack.c.bf16 %v193, %v192
    %v208 = vpack.c.bf16 %v195, %v194
    %209 = vset.pattern.permute.xlu0 1
    %210 = vperm.xlu0 %209, %v30
    %v211 = vpop.permute.xlu0 %210
    %213 = vset.pattern.permute.xlu0 1
    %214 = vperm.xlu0 %213, %v31
    %v215 = vpop.permute.xlu0 %214
    %217 = vset.pattern.permute.xlu0 1
    %218 = vperm.xlu0 %217, %v32
    %v219 = vpop.permute.xlu0 %218
    %221 = vset.pattern.permute.xlu0 1
    %222 = vperm.xlu0 %221, %v33
    %v223 = vpop.permute.xlu0 %222
    %225 = vset.pattern.permute.xlu0 1
    %226 = vperm.xlu0 %225, %v34
    %v227 = vpop.permute.xlu0 %226
    %229 = vset.pattern.permute.xlu0 1
    %230 = vperm.xlu0 %229, %v35
    %v231 = vpop.permute.xlu0 %230
    %233 = vset.pattern.permute.xlu0 1
    %234 = vperm.xlu0 %233, %v36
    %v235 = vpop.permute.xlu0 %234
    %237 = vset.pattern.permute.xlu0 1
    %238 = vperm.xlu0 %237, %v37
    %v239 = vpop.permute.xlu0 %238
    %v249 = vunpack.c.l.b16 %v197
    %v250 = vunpack.c.l.b16 %v198
    %v251 = vunpack.c.l.b16 %v199
    %v252 = vunpack.c.l.b16 %v200
    %v253 = vunpack.c.l.b16 %v201
    %v254 = vunpack.c.l.b16 %v202
    %v255 = vunpack.c.l.b16 %v203
    %v256 = vunpack.c.l.b16 %v204
    %v257 = vpack.c.b16 %v250, %v249
    %v258 = vpack.c.b16 %v252, %v251
    %v259 = vpack.c.b16 %v254, %v253
    %v260 = vpack.c.b16 %v256, %v255
    %vm261 = vcmask 523264
    %v263 = vsel %vm261, %v257, 0
    %v266 = vsel %vm261, %v258, 0
    %v269 = vsel %vm261, %v259, 0
    %v272 = vsel %vm261, %v260, 0
    %274 = vmatprep.subr.bf16.mxu0 0
    %275 = vmatpush1.bf16.msra.mxu0 %v205
    %276 = vmatprep.subr.bf16.mxu0 0
    %277 = vmatpush1.bf16.msra.mxu0 %v206
    %278 = vmatprep.subr.bf16.mxu0 0
    %279 = vmatpush1.bf16.msra.mxu0 %v207
    %280 = vmatprep.subr.bf16.mxu0 0
    %281 = vmatpush1.bf16.msra.mxu0 %v208
    %282 = vmatprep.subr.bf16.mxu0 0
    %283 = vmatpush1.bf16.msra.mxu0 0
    %284 = vmatprep.subr.bf16.mxu0 0
    %285 = vmatpush1.bf16.msra.mxu0 0
    %286 = vmatprep.subr.bf16.mxu0 0
    %287 = vmatpush1.bf16.msra.mxu0 0
    %288 = vmatprep.subr.bf16.mxu0 0
    %289 = vmatpush1.bf16.msra.mxu0 0
    %290 = vmatprep.subr.bf16.mxu0 0
    %291 = vmatpush1.bf16.msra.mxu0 0
    %292 = vmatprep.subr.bf16.mxu0 0
    %293 = vmatpush1.bf16.msra.mxu0 0
    %294 = vmatprep.subr.bf16.mxu0 0
    %295 = vmatpush1.bf16.msra.mxu0 0
    %296 = vmatprep.subr.bf16.mxu0 0
    %297 = vmatpush1.bf16.msra.mxu0 0
    %298 = vmatprep.subr.bf16.mxu0 0
    %299 = vmatpush1.bf16.msra.mxu0 0
    %300 = vmatprep.subr.bf16.mxu0 0
    %301 = vmatpush1.bf16.msra.mxu0 0
    %302 = vmatprep.subr.bf16.mxu0 0
    %303 = vmatpush1.bf16.msra.mxu0 0
    %304 = vmatprep.subr.bf16.mxu0 0
    %305 = vmatpush1.bf16.msra.mxu0 0
    %306 = vmatprep.mubr.bf16.mxu0 0
    %307 = vmatmul.mubr.bf16.gmra.mrb[0].mxu0 %v263
    %v308 = vpop.f32.mrb[0].mxu0
    %v309 = vadd.f32 %v211, %v308
    %v310 = vpop.f32.mrb[0].mxu0
    %v311 = vpop.f32.mrb[0].mxu0
    %v312 = vadd.f32 %v215, %v311
    %v313 = vpop.f32.mrb[0].mxu0
    %314 = vmatprep.mubr.bf16.mxu0 0
    %315 = vmatmul.mubr.bf16.gmra.mrb[0].mxu0 %v266
    %v316 = vpop.f32.mrb[0].mxu0
    %v317 = vadd.f32 %v219, %v316
    %v318 = vpop.f32.mrb[0].mxu0
    %v319 = vpop.f32.mrb[0].mxu0
    %v320 = vadd.f32 %v223, %v319
    %v321 = vpop.f32.mrb[0].mxu0
    %322 = vmatprep.mubr.bf16.mxu0 0
    %323 = vmatmul.mubr.bf16.gmra.mrb[0].mxu0 %v269
    %v324 = vpop.f32.mrb[0].mxu0
    %v325 = vadd.f32 %v227, %v324
    %v326 = vpop.f32.mrb[0].mxu0
    %v327 = vpop.f32.mrb[0].mxu0
    %v328 = vadd.f32 %v231, %v327
    %v329 = vpop.f32.mrb[0].mxu0
    %330 = vmatprep.mubr.bf16.mxu0 0
    %331 = vmatmul.mubr.bf16.gmra.mrb[0].mxu0 %v272
    %v332 = vpop.f32.mrb[0].mxu0
    %v333 = vadd.f32 %v235, %v332
    %v334 = vpop.f32.mrb[0].mxu0
    %v335 = vpop.f32.mrb[0].mxu0
    %v336 = vadd.f32 %v239, %v335
    %v337 = vpop.f32.mrb[0].mxu0
    %338 = vdwg.mxu0
    %v339 = vmax.f32 %v309, 0.0
    %v340 = vmax.f32 %v312, 0.0
    %v341 = vmax.f32 %v317, 0.0
    %v342 = vmax.f32 %v320, 0.0
    %v343 = vmax.f32 %v325, 0.0
    %v344 = vmax.f32 %v328, 0.0
    %v345 = vmax.f32 %v333, 0.0
    %v346 = vmax.f32 %v336, 0.0
    %s347 = scalar_lea.vmem [#allocation2], 64
    %v348 = vld [vmem:[%s347] sm:$0xf]
    %v349 = vld [vmem:[%s347 + $0x4] sm:$0xf]
    %v350 = vld [vmem:[%s347 + $0x8] sm:$0xf]
    %v351 = vld [vmem:[%s347 + $0xc] sm:$0xf]
    %v352 = vld [vmem:[%s347 + $0x10] sm:$0xf]
    %v353 = vld [vmem:[%s347 + $0x14] sm:$0xf]
    %v354 = vld [vmem:[%s347 + $0x18] sm:$0xf]
    %v355 = vld [vmem:[%s347 + $0x1c] sm:$0xf]
    %v356 = vpack.c.bf16 %v340, %v339
    %v357 = vpack.c.bf16 %v342, %v341
    %v358 = vpack.c.bf16 %v344, %v343
    %v359 = vpack.c.bf16 %v346, %v345
    %360 = vset.pattern.permute.xlu0 2
    %361 = vperm.xlu0 %360, %v30
    %v362 = vpop.permute.xlu0 %361
    %364 = vset.pattern.permute.xlu0 2
    %365 = vperm.xlu0 %364, %v31
    %v366 = vpop.permute.xlu0 %365
    %368 = vset.pattern.permute.xlu0 2
    %369 = vperm.xlu0 %368, %v32
    %v370 = vpop.permute.xlu0 %369
    %372 = vset.pattern.permute.xlu0 2
    %373 = vperm.xlu0 %372, %v33
    %v374 = vpop.permute.xlu0 %373
    %376 = vset.pattern.permute.xlu0 2
    %377 = vperm.xlu0 %376, %v34
    %v378 = vpop.permute.xlu0 %377
    %380 = vset.pattern.permute.xlu0 2
    %381 = vperm.xlu0 %380, %v35
    %v382 = vpop.permute.xlu0 %381
    %384 = vset.pattern.permute.xlu0 2
    %385 = vperm.xlu0 %384, %v36
    %v386 = vpop.permute.xlu0 %385
    %388 = vset.pattern.permute.xlu0 2
    %389 = vperm.xlu0 %388, %v37
    %v390 = vpop.permute.xlu0 %389
    %v400 = vunpack.c.l.b16 %v348
    %v401 = vunpack.c.l.b16 %v349
    %v402 = vunpack.c.l.b16 %v350
    %v403 = vunpack.c.l.b16 %v351
    %v404 = vunpack.c.l.b16 %v352
    %v405 = vunpack.c.l.b16 %v353
    %v406 = vunpack.c.l.b16 %v354
    %v407 = vunpack.c.l.b16 %v355
    %v408 = vpack.c.b16 %v401, %v400
    %v409 = vpack.c.b16 %v403, %v402
    %v410 = vpack.c.b16 %v405, %v404
    %v411 = vpack.c.b16 %v407, %v406
    %v413 = vsel %vm261, %v408, 0
    %v416 = vsel %vm261, %v409, 0
    %v419 = vsel %vm261, %v410, 0
    %v422 = vsel %vm261, %v411, 0
    %424 = vmatprep.subr.bf16.mxu0 0
    %425 = vmatpush1.bf16.msra.mxu0 %v356
    %426 = vmatprep.subr.bf16.mxu0 0
    %427 = vmatpush1.bf16.msra.mxu0 %v357
    %428 = vmatprep.subr.bf16.mxu0 0
    %429 = vmatpush1.bf16.msra.mxu0 %v358
    %430 = vmatprep.subr.bf16.mxu0 0
    %431 = vmatpush1.bf16.msra.mxu0 %v359
    %432 = vmatprep.subr.bf16.mxu0 0
    %433 = vmatpush1.bf16.msra.mxu0 0
    %434 = vmatprep.subr.bf16.mxu0 0
    %435 = vmatpush1.bf16.msra.mxu0 0
    %436 = vmatprep.subr.bf16.mxu0 0
    %437 = vmatpush1.bf16.msra.mxu0 0
    %438 = vmatprep.subr.bf16.mxu0 0
    %439 = vmatpush1.bf16.msra.mxu0 0
    %440 = vmatprep.subr.bf16.mxu0 0
    %441 = vmatpush1.bf16.msra.mxu0 0
    %442 = vmatprep.subr.bf16.mxu0 0
    %443 = vmatpush1.bf16.msra.mxu0 0
    %444 = vmatprep.subr.bf16.mxu0 0
    %445 = vmatpush1.bf16.msra.mxu0 0
    %446 = vmatprep.subr.bf16.mxu0 0
    %447 = vmatpush1.bf16.msra.mxu0 0
    %448 = vmatprep.subr.bf16.mxu0 0
    %449 = vmatpush1.bf16.msra.mxu0 0
    %450 = vmatprep.subr.bf16.mxu0 0
    %451 = vmatpush1.bf16.msra.mxu0 0
    %452 = vmatprep.subr.bf16.mxu0 0
    %453 = vmatpush1.bf16.msra.mxu0 0
    %454 = vmatprep.subr.bf16.mxu0 0
    %455 = vmatpush1.bf16.msra.mxu0 0
    %456 = vmatprep.mubr.bf16.mxu0 0
    %457 = vmatmul.mubr.bf16.gmra.mrb[0].mxu0 %v413
    %v458 = vpop.f32.mrb[0].mxu0
    %v459 = vadd.f32 %v362, %v458
    %v460 = vpop.f32.mrb[0].mxu0
    %v461 = vpop.f32.mrb[0].mxu0
    %v462 = vadd.f32 %v366, %v461
    %v463 = vpop.f32.mrb[0].mxu0
    %464 = vmatprep.mubr.bf16.mxu0 0
    %465 = vmatmul.mubr.bf16.gmra.mrb[0].mxu0 %v416
    %v466 = vpop.f32.mrb[0].mxu0
    %v467 = vadd.f32 %v370, %v466
    %v468 = vpop.f32.mrb[0].mxu0
    %v469 = vpop.f32.mrb[0].mxu0
    %v470 = vadd.f32 %v374, %v469
    %v471 = vpop.f32.mrb[0].mxu0
    %472 = vmatprep.mubr.bf16.mxu0 0
    %473 = vmatmul.mubr.bf16.gmra.mrb[0].mxu0 %v419
    %v474 = vpop.f32.mrb[0].mxu0
    %v475 = vadd.f32 %v378, %v474
    %v476 = vpop.f32.mrb[0].mxu0
    %v477 = vpop.f32.mrb[0].mxu0
    %v478 = vadd.f32 %v382, %v477
    %v479 = vpop.f32.mrb[0].mxu0
    %480 = vmatprep.mubr.bf16.mxu0 0
    %481 = vmatmul.mubr.bf16.gmra.mrb[0].mxu0 %v422
    %v482 = vpop.f32.mrb[0].mxu0
    %v483 = vadd.f32 %v386, %v482
    %v484 = vpop.f32.mrb[0].mxu0
    %v485 = vpop.f32.mrb[0].mxu0
    %v486 = vadd.f32 %v390, %v485
    %v487 = vpop.f32.mrb[0].mxu0
    %488 = vdwg.mxu0
    %v489 = vmax.f32 %v459, 0.0
    %v490 = vmax.f32 %v462, 0.0
    %v491 = vmax.f32 %v467, 0.0
    %v492 = vmax.f32 %v470, 0.0
    %v493 = vmax.f32 %v475, 0.0
    %v494 = vmax.f32 %v478, 0.0
    %v495 = vmax.f32 %v483, 0.0
    %v496 = vmax.f32 %v486, 0.0
    %s497 = scalar_lea.vmem [#allocation2], 96
    %v498 = vld [vmem:[%s497] sm:$0xf]
    %v499 = vld [vmem:[%s497 + $0x4] sm:$0xf]
    %v500 = vld [vmem:[%s497 + $0x8] sm:$0xf]
    %v501 = vld [vmem:[%s497 + $0xc] sm:$0xf]
    %v502 = vld [vmem:[%s497 + $0x10] sm:$0xf]
    %v503 = vld [vmem:[%s497 + $0x14] sm:$0xf]
    %v504 = vld [vmem:[%s497 + $0x18] sm:$0xf]
    %v505 = vld [vmem:[%s497 + $0x1c] sm:$0xf]
    %v506 = vpack.c.bf16 %v490, %v489
    %v507 = vpack.c.bf16 %v492, %v491
    %v508 = vpack.c.bf16 %v494, %v493
    %v509 = vpack.c.bf16 %v496, %v495
    %510 = vset.pattern.permute.xlu0 3
    %511 = vperm.xlu0 %510, %v30
    %v512 = vpop.permute.xlu0 %511
    %514 = vset.pattern.permute.xlu0 3
    %515 = vperm.xlu0 %514, %v31
    %v516 = vpop.permute.xlu0 %515
    %517 = vset.pattern.permute.xlu0 3
    %518 = vperm.xlu0 %517, %v32
    %v519 = vpop.permute.xlu0 %518
    %520 = vset.pattern.permute.xlu0 3
    %521 = vperm.xlu0 %520, %v33
    %v522 = vpop.permute.xlu0 %521
    %523 = vset.pattern.permute.xlu0 3
    %524 = vperm.xlu0 %523, %v34
    %v525 = vpop.permute.xlu0 %524
    %526 = vset.pattern.permute.xlu0 3
    %527 = vperm.xlu0 %526, %v35
    %v528 = vpop.permute.xlu0 %527
    %529 = vset.pattern.permute.xlu0 3
    %530 = vperm.xlu0 %529, %v36
    %v531 = vpop.permute.xlu0 %530
    %532 = vset.pattern.permute.xlu0 3
    %533 = vperm.xlu0 %532, %v37
    %v534 = vpop.permute.xlu0 %533
    %v543 = vunpack.c.l.b16 %v498
    %v544 = vunpack.c.l.b16 %v499
    %v545 = vunpack.c.l.b16 %v500
    %v546 = vunpack.c.l.b16 %v501
    %v547 = vunpack.c.l.b16 %v502
    %v548 = vunpack.c.l.b16 %v503
    %v549 = vunpack.c.l.b16 %v504
    %v550 = vunpack.c.l.b16 %v505
    %v551 = vpack.c.b16 %v544, %v543
    %v552 = vpack.c.b16 %v546, %v545
    %v553 = vpack.c.b16 %v548, %v547
    %v554 = vpack.c.b16 %v550, %v549
    %v556 = vsel %vm261, %v551, 0
    %v559 = vsel %vm261, %v552, 0
    %v562 = vsel %vm261, %v553, 0
    %v565 = vsel %vm261, %v554, 0
    %567 = vmatprep.subr.bf16.mxu0 0
    %568 = vmatpush1.bf16.msra.mxu0 %v506
    %569 = vmatprep.subr.bf16.mxu0 0
    %570 = vmatpush1.bf16.msra.mxu0 %v507
    %571 = vmatprep.subr.bf16.mxu0 0
    %572 = vmatpush1.bf16.msra.mxu0 %v508
    %573 = vmatprep.subr.bf16.mxu0 0
    %574 = vmatpush1.bf16.msra.mxu0 %v509
    %575 = vmatprep.subr.bf16.mxu0 0
    %576 = vmatpush1.bf16.msra.mxu0 0
    %577 = vmatprep.subr.bf16.mxu0 0
    %578 = vmatpush1.bf16.msra.mxu0 0
    %579 = vmatprep.subr.bf16.mxu0 0
    %580 = vmatpush1.bf16.msra.mxu0 0
    %581 = vmatprep.subr.bf16.mxu0 0
    %582 = vmatpush1.bf16.msra.mxu0 0
    %583 = vmatprep.subr.bf16.mxu0 0
    %584 = vmatpush1.bf16.msra.mxu0 0
    %585 = vmatprep.subr.bf16.mxu0 0
    %586 = vmatpush1.bf16.msra.mxu0 0
    %587 = vmatprep.subr.bf16.mxu0 0
    %588 = vmatpush1.bf16.msra.mxu0 0
    %589 = vmatprep.subr.bf16.mxu0 0
    %590 = vmatpush1.bf16.msra.mxu0 0
    %591 = vmatprep.subr.bf16.mxu0 0
    %592 = vmatpush1.bf16.msra.mxu0 0
    %593 = vmatprep.subr.bf16.mxu0 0
    %594 = vmatpush1.bf16.msra.mxu0 0
    %595 = vmatprep.subr.bf16.mxu0 0
    %596 = vmatpush1.bf16.msra.mxu0 0
    %597 = vmatprep.subr.bf16.mxu0 0
    %598 = vmatpush1.bf16.msra.mxu0 0
    %599 = vmatprep.mubr.bf16.mxu0 0
    %600 = vmatmul.mubr.bf16.gmra.mrb[0].mxu0 %v556
    %v601 = vpop.f32.mrb[0].mxu0
    %v602 = vadd.f32 %v512, %v601
    %v603 = vpop.f32.mrb[0].mxu0
    %v604 = vpop.f32.mrb[0].mxu0
    %v605 = vpop.f32.mrb[0].mxu0
    %606 = vmatprep.mubr.bf16.mxu0 0
    %607 = vmatmul.mubr.bf16.gmra.mrb[0].mxu0 %v559
    %v608 = vpop.f32.mrb[0].mxu0
    %v609 = vpop.f32.mrb[0].mxu0
    %v610 = vpop.f32.mrb[0].mxu0
    %v611 = vpop.f32.mrb[0].mxu0
    %612 = vmatprep.mubr.bf16.mxu0 0
    %613 = vmatmul.mubr.bf16.gmra.mrb[0].mxu0 %v562
    %v614 = vpop.f32.mrb[0].mxu0
    %v615 = vpop.f32.mrb[0].mxu0
    %v616 = vpop.f32.mrb[0].mxu0
    %v617 = vpop.f32.mrb[0].mxu0
    %618 = vmatprep.mubr.bf16.mxu0 0
    %619 = vmatmul.mubr.bf16.gmra.mrb[0].mxu0 %v565
    %v620 = vpop.f32.mrb[0].mxu0
    %v621 = vpop.f32.mrb[0].mxu0
    %v622 = vpop.f32.mrb[0].mxu0
    %v623 = vpop.f32.mrb[0].mxu0
    %624 = vdwg.mxu0
    %625 = vst [vmem:[%s3] sm:$0x1] %v602
    // Predicated region
    $region18: #{value_net_forward.1} parent=1 // pred_check
      _
    $region19: #{value_net_forward.1} parent=1 // pred_check_branch
      %627 = sbr.rel (0) target = $region21
    $region20: #{value_net_forward.1} parent=1 // pred_region
      _
    $region21: #{value_net_forward.1} parent=1 // pred_fallthru
      _
    // Predicated region
    $region22: #{value_net_forward.1} parent=1 // pred_check
      _
    $region23: #{value_net_forward.1} parent=1 // pred_check_branch
      %629 = sbr.rel (0) target = $region25
    $region24: #{value_net_forward.1} parent=1 // pred_region
      _
    $region25: #{value_net_forward.1} parent=1 // pred_fallthru
      _
    %630 = vsyncpa [#allocation3], 1

</llo_original>
